<compile_context>
chip_gen: v7x
topology: tpu7x:2x2x1
jax: 0.10.0
libtpu: 0.0.40
codegen_flags: <defaults>
</compile_context>

<pallas_src>
import functools

import jax
import jax.numpy as jnp
from jax.experimental import pallas as pl
from jax.experimental.pallas import tpu as pltpu


def _round_up(n, m):
    return ((n + m - 1) // m) * m


@functools.lru_cache(maxsize=None)
def _is_v7x():
    """Best-effort chip-generation probe; falls back to False (v5e/v6e policy)."""
    try:
        kind = jax.devices()[0].device_kind.lower()
        return ("v7" in kind) or ("tpu7" in kind)
    except Exception:
        return False


def _qnet_kernel(x_ref, w1_ref, b1_ref, w2_ref, b2_ref, w3_ref, b3_ref, o_ref):
    # Fused 3-layer MLP: relu(x@W1+b1) -> relu(.@W2+b2) -> .@W3+b3
    # Layers 1-2: bf16 operands on the MXU, f32 accumulation.
    # Layer 3: f32 (small; keeps Q-value error tight).
    x = x_ref[...].astype(jnp.bfloat16)                                # (TM, S)
    h1 = jnp.dot(x, w1_ref[...], preferred_element_type=jnp.float32) + b1_ref[...]
    h1 = jnp.maximum(h1, 0.0).astype(jnp.bfloat16)                     # (TM, 400)
    h2 = jnp.dot(h1, w2_ref[...], preferred_element_type=jnp.float32) + b2_ref[...]
    h2 = jnp.maximum(h2, 0.0)                                          # (TM, 300) f32
    o = jnp.dot(h2, w3_ref[...], preferred_element_type=jnp.float32) + b3_ref[...]
    o_ref[...] = o.astype(o_ref.dtype)


def init_qnetwork_params(key, state_dim, action_dim):
    """Deterministic init mirroring nn.Linear default U[-1/sqrt(in), 1/sqrt(in)].
    Unpadded f32 weights stored (in, out); biases stored (1, out)."""
    dims = [(state_dim, 400), (400, 300), (300, action_dim * 11)]
    params = []
    for fan_in, fan_out in dims:
        key, kw, kb = jax.random.split(key, 3)
        bound = 1.0 / jnp.sqrt(jnp.float32(fan_in))
        w = jax.random.uniform(kw, (fan_in, fan_out), jnp.float32, -bound, bound)
        b = jax.random.uniform(kb, (1, fan_out), jnp.float32, -bound, bound)
        params += [w, b]
    return tuple(params)


def pack_qnetwork_params(params, action_dim):
    """One-time packing: w1/w2 -> bf16 (unpadded), w3/b3 stay f32 with only the
    output dim zero-padded to a multiple of 128 (lane-dense final store)."""
    w1, b1, w2, b2, w3, b3 = params
    out_dim = action_dim * 11
    no = _round_up(out_dim, 128)
    w3p = jnp.zeros((w3.shape[0], no), jnp.float32).at[:, :out_dim].set(w3)
    b3p = jnp.zeros((1, no), jnp.float32).at[:, :out_dim].set(b3)
    return (
        w1.astype(jnp.bfloat16),
        b1.astype(jnp.float32),
        w2.astype(jnp.bfloat16),
        b2.astype(jnp.float32),
        w3p,
        b3p,
    )


@functools.partial(jax.jit, static_argnames=("action_dim",))
def qnetwork_forward(x, packed_params, action_dim):
    """x: (B, state_dim) f32 -> (B, action_dim, 11) f32."""
    w1, b1, w2, b2, w3, b3 = packed_params
    B, state_dim = x.shape
    h1 = w1.shape[1]
    h2 = w2.shape[1]
    no = w3.shape[1]

    # Batch (sublane) tiling: floor at 16 rows (bf16-native tile).  On v7x cap
    # the tile at 128 so batches >128 give grid_m >= 2 and shard across both
    # TensorCores; on v5e/v6e keep up to 256-row tiles (single TC, fewer steps).
    tm_cap = 128 if _is_v7x() else 256
    tm = min(tm_cap, _round_up(max(B, 16), 16))
    b_pad = _round_up(B, tm)
    grid_m = b_pad // tm

    # Only the batch rows are padded (tiny pad op, or no-op for aligned batches);
    # K stays at state_dim (full-dim block) and the bf16 cast happens in-kernel.
    x_pad = x if b_pad == B else jnp.pad(x, ((0, b_pad - B), (0, 0)))

    flops = 2 * b_pad * (state_dim * h1 + h1 * h2 + h2 * no)
    bytes_accessed = (
        x_pad.size * 4
        + (w1.size + w2.size) * 2
        + w3.size * 4
        + (b1.size + b2.size + b3.size) * 4
        + b_pad * no * 4
    )

    flat = pl.pallas_call(
        _qnet_kernel,
        out_shape=jax.ShapeDtypeStruct((b_pad, no), jnp.float32),
        grid=(grid_m,),
        in_specs=[
            pl.BlockSpec((tm, state_dim), lambda i: (i, 0)),   # x tile follows batch
            pl.BlockSpec((state_dim, h1), lambda i: (0, 0)),   # weights: VMEM-resident
            pl.BlockSpec((1, h1), lambda i: (0, 0)),
            pl.BlockSpec((h1, h2), lambda i: (0, 0)),
            pl.BlockSpec((1, h2), lambda i: (0, 0)),
            pl.BlockSpec((h2, no), lambda i: (0, 0)),
            pl.BlockSpec((1, no), lambda i: (0, 0)),
        ],
        out_specs=pl.BlockSpec((tm, no), lambda i: (i, 0)),
        compiler_params=pltpu.CompilerParams(
            dimension_semantics=("parallel",),
        ),
        cost_estimate=pl.CostEstimate(
            flops=flops, transcendentals=0, bytes_accessed=bytes_accessed),
    )(x_pad, w1, b1, w2, b2, w3, b3)

    out_dim = action_dim * 11
    return flat[:B, :out_dim].reshape(B, action_dim, 11)


def _reference_forward(x, params, action_dim):
    w1, b1, w2, b2, w3, b3 = params
    h1 = jnp.maximum(x @ w1 + b1, 0.0)
    h2 = jnp.maximum(h1 @ w2 + b2, 0.0)
    o = h2 @ w3 + b3
    return o.reshape(x.shape[0], action_dim, 11)


if __name__ == "__main__":
    key = jax.random.PRNGKey(0)
    k_params, k_x = jax.random.split(key)

    batch = 2
    state_dim = 16
    action_dim = 4

    params = init_qnetwork_params(k_params, state_dim, action_dim)
    packed = pack_qnetwork_params(params, action_dim)   # pack once, reuse per step
    x = jax.random.normal(k_x, (batch, state_dim), jnp.float32)

    out = qnetwork_forward(x, packed, action_dim)
    jax.block_until_ready(out)

    assert out.shape == (batch, action_dim, 11), out.shape

    ref = _reference_forward(x, params, action_dim)
    # bf16 weights in layers 1-2 (f32 accumulation, f32 final layer): loosened tol.
    max_err = float(jnp.max(jnp.abs(out - ref)))
    assert jnp.allclose(out, ref, atol=3e-2, rtol=3e-2), f"mismatch: {max_err}"

    print("KERNEL_OK")
</pallas_src>

<mosaic_0001>
module attributes {stable_mosaic.version = 11 : i64} {
  func.func @_qnet_kernel(%arg0: i32, %arg1: memref<16x16xf32, #tpu.memory_space<vmem>>, %arg2: memref<16x400xbf16, #tpu.memory_space<vmem>>, %arg3: memref<1x400xf32, #tpu.memory_space<vmem>>, %arg4: memref<400x300xbf16, #tpu.memory_space<vmem>>, %arg5: memref<1x300xf32, #tpu.memory_space<vmem>>, %arg6: memref<300x128xf32, #tpu.memory_space<vmem>>, %arg7: memref<1x128xf32, #tpu.memory_space<vmem>>, %arg8: memref<16x128xf32, #tpu.memory_space<vmem>>) attributes {dimension_semantics = [#tpu.dimension_semantics<parallel>], iteration_bounds = array<i64: 1>, scalar_prefetch = 0 : i64, scratch_operands = 0 : i64, tpu.core_type = #tpu.core_type<tc>, window_params = [{transform_indices = @transform_0, window_bounds = array<i64: 16, 16>}, {pipeline_mode = #tpu.pipeline_mode<synchronous>, transform_indices = @transform_1, window_bounds = array<i64: 16, 400>}, {pipeline_mode = #tpu.pipeline_mode<synchronous>, transform_indices = @transform_2, window_bounds = array<i64: 1, 400>}, {pipeline_mode = #tpu.pipeline_mode<synchronous>, transform_indices = @transform_3, window_bounds = array<i64: 400, 300>}, {pipeline_mode = #tpu.pipeline_mode<synchronous>, transform_indices = @transform_4, window_bounds = array<i64: 1, 300>}, {pipeline_mode = #tpu.pipeline_mode<synchronous>, transform_indices = @transform_5, window_bounds = array<i64: 300, 128>}, {pipeline_mode = #tpu.pipeline_mode<synchronous>, transform_indices = @transform_6, window_bounds = array<i64: 1, 128>}, {transform_indices = @transform_7, window_bounds = array<i64: 16, 128>}]} {
    %c0 = arith.constant 0 : index
    %c0_0 = arith.constant 0 : index
    %0 = vector.load %arg1[%c0, %c0_0] : memref<16x16xf32, #tpu.memory_space<vmem>>, vector<16x16xf32>
    %1 = arith.truncf %0 : vector<16x16xf32> to vector<16x16xbf16>
    %c0_1 = arith.constant 0 : index
    %c0_2 = arith.constant 0 : index
    %2 = vector.load %arg2[%c0_1, %c0_2] : memref<16x400xbf16, #tpu.memory_space<vmem>>, vector<16x400xbf16>
    %cst = arith.constant dense<0.000000e+00> : vector<16x400xf32>
    %3 = tpu.matmul %1, %2, %cst {dimension_numbers = #tpu.dot_dimension_numbers<[1], [0], [0], [1], [0, 0, 1, 1], [], []>} : vector<16x16xbf16>, vector<16x400xbf16>, vector<16x400xf32> -> vector<16x400xf32>
    %c0_3 = arith.constant 0 : index
    %c0_4 = arith.constant 0 : index
    %4 = vector.load %arg3[%c0_3, %c0_4] : memref<1x400xf32, #tpu.memory_space<vmem>>, vector<1x400xf32>
    %5 = vector.broadcast %4 : vector<1x400xf32> to vector<16x400xf32>
    %6 = arith.addf %3, %5 : vector<16x400xf32>
    %cst_5 = arith.constant 0.000000e+00 : f32
    %7 = vector.broadcast %cst_5 : f32 to vector<16x400xf32>
    %8 = arith.maximumf %6, %7 : vector<16x400xf32>
    %9 = arith.truncf %8 : vector<16x400xf32> to vector<16x400xbf16>
    %c0_6 = arith.constant 0 : index
    %c0_7 = arith.constant 0 : index
    %10 = vector.load %arg4[%c0_6, %c0_7] : memref<400x300xbf16, #tpu.memory_space<vmem>>, vector<400x300xbf16>
    %cst_8 = arith.constant dense<0.000000e+00> : vector<16x300xf32>
    %11 = tpu.matmul %9, %10, %cst_8 {dimension_numbers = #tpu.dot_dimension_numbers<[1], [0], [0], [1], [0, 0, 1, 1], [], []>} : vector<16x400xbf16>, vector<400x300xbf16>, vector<16x300xf32> -> vector<16x300xf32>
    %c0_9 = arith.constant 0 : index
    %c0_10 = arith.constant 0 : index
    %12 = vector.load %arg5[%c0_9, %c0_10] : memref<1x300xf32, #tpu.memory_space<vmem>>, vector<1x300xf32>
    %13 = vector.broadcast %12 : vector<1x300xf32> to vector<16x300xf32>
    %14 = arith.addf %11, %13 : vector<16x300xf32>
    %cst_11 = arith.constant 0.000000e+00 : f32
    %15 = vector.broadcast %cst_11 : f32 to vector<16x300xf32>
    %16 = arith.maximumf %14, %15 : vector<16x300xf32>
    %c0_12 = arith.constant 0 : index
    %c0_13 = arith.constant 0 : index
    %17 = vector.load %arg6[%c0_12, %c0_13] : memref<300x128xf32, #tpu.memory_space<vmem>>, vector<300x128xf32>
    %cst_14 = arith.constant dense<0.000000e+00> : vector<16x128xf32>
    %18 = tpu.matmul %16, %17, %cst_14 {dimension_numbers = #tpu.dot_dimension_numbers<[1], [0], [0], [1], [0, 0, 1, 1], [], []>} : vector<16x300xf32>, vector<300x128xf32>, vector<16x128xf32> -> vector<16x128xf32>
    %c0_15 = arith.constant 0 : index
    %c0_16 = arith.constant 0 : index
    %19 = vector.load %arg7[%c0_15, %c0_16] : memref<1x128xf32, #tpu.memory_space<vmem>>, vector<1x128xf32>
    %20 = vector.broadcast %19 : vector<1x128xf32> to vector<16x128xf32>
    %21 = arith.addf %18, %20 : vector<16x128xf32>
    %c0_17 = arith.constant 0 : index
    %c0_18 = arith.constant 0 : index
    %22 = vector.load %arg8[%c0_17, %c0_18] : memref<16x128xf32, #tpu.memory_space<vmem>>, vector<16x128xf32>
    tpu.vector_store %arg8[%c0_17, %c0_18], %21 {strides = array<i32>} : memref<16x128xf32, #tpu.memory_space<vmem>>, vector<16x128xf32>,
    return
  }
  func.func @transform_0(%arg0: i32) -> (i32, i32) {
    %c0_i32 = arith.constant 0 : i32
    %c0_i32_0 = arith.constant 0 : i32
    return %arg0, %c0_i32 : i32, i32
  }
  func.func @transform_1(%arg0: i32) -> (i32, i32) {
    %c0_i32 = arith.constant 0 : i32
    %c0_i32_0 = arith.constant 0 : i32
    %c0_i32_1 = arith.constant 0 : i32
    return %c0_i32, %c0_i32_0 : i32, i32
  }
  func.func @transform_2(%arg0: i32) -> (i32, i32) {
    %c0_i32 = arith.constant 0 : i32
    %c0_i32_0 = arith.constant 0 : i32
    %c0_i32_1 = arith.constant 0 : i32
    return %c0_i32, %c0_i32_0 : i32, i32
  }
  func.func @transform_3(%arg0: i32) -> (i32, i32) {
    %c0_i32 = arith.constant 0 : i32
    %c0_i32_0 = arith.constant 0 : i32
    %c0_i32_1 = arith.constant 0 : i32
    return %c0_i32, %c0_i32_0 : i32, i32
  }
  func.func @transform_4(%arg0: i32) -> (i32, i32) {
    %c0_i32 = arith.constant 0 : i32
    %c0_i32_0 = arith.constant 0 : i32
    %c0_i32_1 = arith.constant 0 : i32
    return %c0_i32, %c0_i32_0 : i32, i32
  }
  func.func @transform_5(%arg0: i32) -> (i32, i32) {
    %c0_i32 = arith.constant 0 : i32
    %c0_i32_0 = arith.constant 0 : i32
    %c0_i32_1 = arith.constant 0 : i32
    return %c0_i32, %c0_i32_0 : i32, i32
  }
  func.func @transform_6(%arg0: i32) -> (i32, i32) {
    %c0_i32 = arith.constant 0 : i32
    %c0_i32_0 = arith.constant 0 : i32
    %c0_i32_1 = arith.constant 0 : i32
    return %c0_i32, %c0_i32_0 : i32, i32
  }
  func.func @transform_7(%arg0: i32) -> (i32, i32) {
    %c0_i32 = arith.constant 0 : i32
    %c0_i32_0 = arith.constant 0 : i32
    return %arg0, %c0_i32 : i32, i32
  }
}

</mosaic_0001>

<llo_original>
// kernel: qnetwork_forward.1
$region0: #{qnetwork_forward.1}
  #allocation0 [shape = 'u32[]', space=smem, size = 0x4, offset = 0x4, fixed_abs, tag = 'smem constant byte address 0x4 - core index']
  #allocation1 [shape = 'u32[144,128]{1,0:T(1,128)}', space=vmem, size = 0x12000, scoped, tag = 'internal scratch']
  %s0 = inlined_call_operand.vmem [shape: f32[16,16], index: 0, kind: input, shape index: {}]
  %s1 = inlined_call_operand.hbm [shape: bf16[16,400], index: 1, kind: input, shape index: {}]
  %s2 = inlined_call_operand.vmem [shape: f32[1,400], index: 2, kind: input, shape index: {}]
  %s3 = inlined_call_operand.hbm [shape: bf16[400,300], index: 3, kind: input, shape index: {}]
  %s4 = inlined_call_operand.vmem [shape: f32[1,300], index: 4, kind: input, shape index: {}]
  %s5 = inlined_call_operand.hbm [shape: f32[300,128], index: 5, kind: input, shape index: {}]
  %s6 = inlined_call_operand.vmem [shape: f32[1,128], index: 6, kind: input, shape index: {}]
  %s7 = inlined_call_operand.vmem [shape: f32[16,128], index: 7, kind: output, shape index: {}]
  %s8 = sld [smem:[#allocation0]]
  $region50: #{qnetwork_forward.1} parent=0
    _
  %s10 = ssub.s32 1, %s8
  %s11 = scalar_select 0, %s10, %s8
  $region1: #{qnetwork_forward.1} parent=0
    #allocation2 [shape = 'u8[16384]{0}', space=vmem, size = 0x4000, scoped, tag = 'input window, operand 1, single buffered']
    #allocation3 [shape = 's32[1]{0}', space=sflag, size = 0x4, scoped, tag = 'scoped memory for qnetwork_forward.1']
    #allocation4 [shape = 'u8[307200]{0}', space=vmem, size = 0x4b000, scoped, tag = 'input window, operand 3, single buffered']
    #allocation5 [shape = 's32[1]{0}', space=sflag, size = 0x4, scoped, tag = 'scoped memory for qnetwork_forward.1']
    #allocation6 [shape = 'u8[155648]{0}', space=vmem, size = 0x26000, scoped, tag = 'input window, operand 5, single buffered']
    %12 = vsyncpa [#allocation3], 0
    %13 = vsyncpa [#allocation5], 0
    // Predicated region
    $region2: #{qnetwork_forward.1} parent=1 // pred_check
      _
    $region3: #{qnetwork_forward.1} parent=1 // pred_check_branch
      %15 = sbr.rel (0) target = $region5
    $region4: #{qnetwork_forward.1} parent=1 // pred_region
      _
    $region5: #{qnetwork_forward.1} parent=1 // pred_fallthru
      _
    // Predicated region
    $region6: #{qnetwork_forward.1} parent=1 // pred_check
      _
    $region7: #{qnetwork_forward.1} parent=1 // pred_check_branch
      %17 = sbr.rel (0) target = $region9
    $region8: #{qnetwork_forward.1} parent=1 // pred_region
      %s19 = ssub.s32 512, 512
      %20 = vsyncadd [#allocation3], %s19
      %s21 = sshll.u32 [#allocation2], 4
      %s22 = int_to_ptr.vmem [resolvable:$true] %s21
      %27 = dma.hbm_to_vmem [thread:$0]  %s1, 512, %s22, [#allocation3], 256, 256, 16
    $region9: #{qnetwork_forward.1} parent=1 // pred_fallthru
      _
    // Predicated region
    $region10: #{qnetwork_forward.1} parent=1 // pred_check
      _
    $region11: #{qnetwork_forward.1} parent=1 // pred_check_branch
      %29 = sbr.rel (0) target = $region13
    $region12: #{qnetwork_forward.1} parent=1 // pred_region
      _
    $region13: #{qnetwork_forward.1} parent=1 // pred_fallthru
      _
    // Predicated region
    $region14: #{qnetwork_forward.1} parent=1 // pred_check
      _
    $region15: #{qnetwork_forward.1} parent=1 // pred_check_branch
      %31 = sbr.rel (0) target = $region17
    $region16: #{qnetwork_forward.1} parent=1 // pred_region
      %s33 = ssub.s32 9600, 9600
      %34 = vsyncadd [#allocation5], %s33
      %s35 = sshll.u32 [#allocation4], 4
      %s36 = int_to_ptr.vmem [resolvable:$true] %s35
      %41 = dma.hbm_to_vmem [thread:$0]  %s3, 9600, %s36, [#allocation5], 192, 192, 12
    $region17: #{qnetwork_forward.1} parent=1 // pred_fallthru
      _
    // Predicated region
    $region18: #{qnetwork_forward.1} parent=1 // pred_check
      _
    $region19: #{qnetwork_forward.1} parent=1 // pred_check_branch
      %43 = sbr.rel (0) target = $region21
    $region20: #{qnetwork_forward.1} parent=1 // pred_region
      _
    $region21: #{qnetwork_forward.1} parent=1 // pred_fallthru
      _
    // Predicated region
    $region22: #{qnetwork_forward.1} parent=1 // pred_check
      _
    $region23: #{qnetwork_forward.1} parent=1 // pred_check_branch
      %45 = sbr.rel (0) target = $region25
    $region24: #{qnetwork_forward.1} parent=1 // pred_region
      %s47 = ssub.s32 4864, 4864
      %48 = vsyncadd [#allocation5], %s47
      %s49 = sshll.u32 [#allocation6], 4
      %s50 = int_to_ptr.vmem [resolvable:$true] %s49
      %55 = dma.hbm_to_vmem [thread:$0]  %s5, 4864, %s50, [#allocation5], 128, 128, 8
    $region25: #{qnetwork_forward.1} parent=1 // pred_fallthru
      _
    // Predicated region
    $region26: #{qnetwork_forward.1} parent=1 // pred_check
      _
    $region27: #{qnetwork_forward.1} parent=1 // pred_check_branch
      %57 = sbr.rel (0) target = $region29
    $region28: #{qnetwork_forward.1} parent=1 // pred_region
      _
    $region29: #{qnetwork_forward.1} parent=1 // pred_fallthru
      _
    // Predicated region
    $region30: #{qnetwork_forward.1} parent=1 // pred_check
      _
    $region31: #{qnetwork_forward.1} parent=1 // pred_check_branch
      %59 = sbr.rel (0) target = $region33
    $region32: #{qnetwork_forward.1} parent=1 // pred_region
      %60 = dma.done [#allocation3], 512
    $region33: #{qnetwork_forward.1} parent=1 // pred_fallthru
      _
    // Predicated region
    $region34: #{qnetwork_forward.1} parent=1 // pred_check
      _
    $region35: #{qnetwork_forward.1} parent=1 // pred_check_branch
      %62 = sbr.rel (0) target = $region37
    $region36: #{qnetwork_forward.1} parent=1 // pred_region
      %63 = dma.done [#allocation5], 9600
    $region37: #{qnetwork_forward.1} parent=1 // pred_fallthru
      _
    // Predicated region
    $region38: #{qnetwork_forward.1} parent=1 // pred_check
      _
    $region39: #{qnetwork_forward.1} parent=1 // pred_check_branch
      %65 = sbr.rel (0) target = $region41
    $region40: #{qnetwork_forward.1} parent=1 // pred_region
      %66 = dma.done [#allocation5], 4864
    $region41: #{qnetwork_forward.1} parent=1 // pred_fallthru
      _
    %v68 = vld [vmem:[%s0] sm:$0xff]
    %v69 = vld [vmem:[%s0 + $0x8] sm:$0xff]
    %v70 = vpack.c.bf16 %v69, %v68
    %v71 = vld [vmem:[#allocation2] sm:$0xff]
    %v72 = vld [vmem:[#allocation2 + $0x8] sm:$0xff]
    %v73 = vld [vmem:[#allocation2 + $0x10] sm:$0xff]
    %v74 = vld [vmem:[#allocation2 + $0x18] sm:$0xff]
    %v75 = vld [vmem:[%s2] sm:$0xf]
    %v77 = vlaneseq
    %v78 = vshrl.u32 %v77, 7
    %v79 = vsub.s32 0, %v78
    %v80 = vrot.slane %v75, %v79
    %v81 = vlaneseq
    %v82 = vshrl.u32 %v81, 7
    %v83 = vsub.s32 1, %v82
    %v84 = vrot.slane %v75, %v83
    %v85 = vlaneseq
    %v86 = vshrl.u32 %v85, 7
    %v87 = vsub.s32 2, %v86
    %v88 = vrot.slane %v75, %v87
    %v89 = vlaneseq
    %v90 = vshrl.u32 %v89, 7
    %v91 = vsub.s32 3, %v90
    %v92 = vrot.slane %v75, %v91
    %v101 = vunpack.c.l.b16 %v71
    %v102 = vunpack.c.h.b16 %v71
    %v103 = vunpack.c.l.b16 %v72
    %v104 = vunpack.c.h.b16 %v72
    %v105 = vunpack.c.l.b16 %v73
    %v106 = vunpack.c.h.b16 %v73
    %v107 = vunpack.c.l.b16 %v74
    %v108 = vunpack.c.h.b16 %v74
    %v109 = vpack.c.b16 %v105, %v101
    %v110 = vpack.c.b16 %v106, %v102
    %v111 = vpack.c.b16 %v107, %v103
    %v112 = vpack.c.b16 %v108, %v104
    %vm117 = vcmask 130048
    %v119 = vsel %vm117, %v70, 0
    %121 = vmatprep.subr.bf16.mxu0 %v110
    %122 = vmatpush1.bf16.msra.mxu0 %v109
    %123 = vmatprep.subr.bf16.mxu0 0
    %124 = vmatpush1.bf16.msra.mxu0 0
    %125 = vmatprep.subr.bf16.mxu0 0
    %126 = vmatpush1.bf16.msra.mxu0 0
    %127 = vmatprep.subr.bf16.mxu0 0
    %128 = vmatpush1.bf16.msra.mxu0 0
    %129 = vmatprep.subr.bf16.mxu0 0
    %130 = vmatpush1.bf16.msra.mxu0 0
    %131 = vmatprep.subr.bf16.mxu0 0
    %132 = vmatpush1.bf16.msra.mxu0 0
    %133 = vmatprep.subr.bf16.mxu0 0
    %134 = vmatpush1.bf16.msra.mxu0 0
    %135 = vmatprep.subr.bf16.mxu0 0
    %136 = vmatpush1.bf16.msra.mxu0 0
    %137 = vmatprep.subr.bf16.mxu0 0
    %138 = vmatpush1.bf16.msra.mxu0 0
    %139 = vmatprep.subr.bf16.mxu0 0
    %140 = vmatpush1.bf16.msra.mxu0 0
    %141 = vmatprep.subr.bf16.mxu0 0
    %142 = vmatpush1.bf16.msra.mxu0 0
    %143 = vmatprep.subr.bf16.mxu0 0
    %144 = vmatpush1.bf16.msra.mxu0 0
    %145 = vmatprep.subr.bf16.mxu0 0
    %146 = vmatpush1.bf16.msra.mxu0 0
    %147 = vmatprep.subr.bf16.mxu0 0
    %148 = vmatpush1.bf16.msra.mxu0 0
    %149 = vmatprep.subr.bf16.mxu0 0
    %150 = vmatpush1.bf16.msra.mxu0 0
    %151 = vmatprep.subr.bf16.mxu0 0
    %152 = vmatpush1.bf16.msra.mxu0 0
    %153 = vmatprep.mubr.bf16.mxu0 0
    %154 = vmatmul.mubr.bf16.gmra.mrb[0].mxu0 %v119
    %v155 = vpop.f32.mrb[0].mxu0
    %v156 = vadd.f32 %v80, %v155
    %v157 = vpop.f32.mrb[0].mxu0
    %v158 = vadd.f32 %v84, %v157
    %v159 = vpop.f32.mrb[0].mxu0
    %v160 = vadd.f32 %v80, %v159
    %v161 = vpop.f32.mrb[0].mxu0
    %v162 = vadd.f32 %v84, %v161
    %163 = vdwg.mxu0
    %164 = vmatprep.subr.bf16.mxu0 %v112
    %165 = vmatpush1.bf16.msra.mxu0 %v111
    %166 = vmatprep.subr.bf16.mxu0 0
    %167 = vmatpush1.bf16.msra.mxu0 0
    %168 = vmatprep.subr.bf16.mxu0 0
    %169 = vmatpush1.bf16.msra.mxu0 0
    %170 = vmatprep.subr.bf16.mxu0 0
    %171 = vmatpush1.bf16.msra.mxu0 0
    %172 = vmatprep.subr.bf16.mxu0 0
    %173 = vmatpush1.bf16.msra.mxu0 0
    %174 = vmatprep.subr.bf16.mxu0 0
    %175 = vmatpush1.bf16.msra.mxu0 0
    %176 = vmatprep.subr.bf16.mxu0 0
    %177 = vmatpush1.bf16.msra.mxu0 0
    %178 = vmatprep.subr.bf16.mxu0 0
    %179 = vmatpush1.bf16.msra.mxu0 0
    %180 = vmatprep.subr.bf16.mxu0 0
    %181 = vmatpush1.bf16.msra.mxu0 0
    %182 = vmatprep.subr.bf16.mxu0 0
    %183 = vmatpush1.bf16.msra.mxu0 0
    %184 = vmatprep.subr.bf16.mxu0 0
    %185 = vmatpush1.bf16.msra.mxu0 0
    %186 = vmatprep.subr.bf16.mxu0 0
    %187 = vmatpush1.bf16.msra.mxu0 0
    %188 = vmatprep.subr.bf16.mxu0 0
    %189 = vmatpush1.bf16.msra.mxu0 0
    %190 = vmatprep.subr.bf16.mxu0 0
    %191 = vmatpush1.bf16.msra.mxu0 0
    %192 = vmatprep.subr.bf16.mxu0 0
    %193 = vmatpush1.bf16.msra.mxu0 0
    %194 = vmatprep.subr.bf16.mxu0 0
    %195 = vmatpush1.bf16.msra.mxu0 0
    %196 = vmatprep.mubr.bf16.mxu0 0
    %197 = vmatmul.mubr.bf16.gmra.mrb[0].mxu0 %v119
    %v198 = vpop.f32.mrb[0].mxu0
    %v199 = vadd.f32 %v88, %v198
    %v200 = vpop.f32.mrb[0].mxu0
    %v201 = vadd.f32 %v92, %v200
    %v202 = vpop.f32.mrb[0].mxu0
    %v203 = vadd.f32 %v88, %v202
    %v204 = vpop.f32.mrb[0].mxu0
    %v205 = vadd.f32 %v92, %v204
    %206 = vdwg.mxu0
    %v207 = vmax.f32 %v156, 0.0
    %v208 = vmax.f32 %v158, 0.0
    %v209 = vmax.f32 %v199, 0.0
    %v210 = vmax.f32 %v201, 0.0
    %v211 = vmax.f32 %v160, 0.0
    %v212 = vmax.f32 %v162, 0.0
    %v213 = vmax.f32 %v203, 0.0
    %v214 = vmax.f32 %v205, 0.0
    %v215 = vpack.c.bf16 %v211, %v207
    %v216 = vpack.c.bf16 %v212, %v208
    %v217 = vpack.c.bf16 %v213, %v209
    %v218 = vpack.c.bf16 %v214, %v210
    %v219 = vld [vmem:[#allocation4] sm:$0xff]
    %v220 = vld [vmem:[#allocation4 + $0x8] sm:$0xf]
    %v221 = vld [vmem:[#allocation4 + $0xc] sm:$0xff]
    %v222 = vld [vmem:[#allocation4 + $0x14] sm:$0xf]
    %v223 = vld [vmem:[#allocation4 + $0x18] sm:$0xff]
    %v224 = vld [vmem:[#allocation4 + $0x20] sm:$0xf]
    %v225 = vld [vmem:[#allocation4 + $0x24] sm:$0xff]
    %v226 = vld [vmem:[#allocation4 + $0x2c] sm:$0xf]
    %v227 = vld [vmem:[#allocation4 + $0x30] sm:$0xff]
    %v228 = vld [vmem:[#allocation4 + $0x38] sm:$0xf]
    %v229 = vld [vmem:[#allocation4 + $0x3c] sm:$0xff]
    %v230 = vld [vmem:[#allocation4 + $0x44] sm:$0xf]
    %v231 = vld [vmem:[#allocation4 + $0x48] sm:$0xff]
    %v232 = vld [vmem:[#allocation4 + $0x50] sm:$0xf]
    %v233 = vld [vmem:[#allocation4 + $0x54] sm:$0xff]
    %v234 = vld [vmem:[#allocation4 + $0x5c] sm:$0xf]
    %v235 = vld [vmem:[#allocation4 + $0x60] sm:$0xff]
    %v236 = vld [vmem:[#allocation4 + $0x68] sm:$0xf]
    %v237 = vld [vmem:[#allocation4 + $0x6c] sm:$0xff]
    %v238 = vld [vmem:[#allocation4 + $0x74] sm:$0xf]
    %v239 = vld [vmem:[#allocation4 + $0x78] sm:$0xff]
    %v240 = vld [vmem:[#allocation4 + $0x80] sm:$0xf]
    %v241 = vld [vmem:[#allocation4 + $0x84] sm:$0xff]
    %v242 = vld [vmem:[#allocation4 + $0x8c] sm:$0xf]
    %v243 = vld [vmem:[#allocation4 + $0x90] sm:$0xff]
    %v244 = vld [vmem:[#allocation4 + $0x98] sm:$0xf]
    %v245 = vld [vmem:[#allocation4 + $0x9c] sm:$0xff]
    %v246 = vld [vmem:[#allocation4 + $0xa4] sm:$0xf]
    %v247 = vld [vmem:[#allocation4 + $0xa8] sm:$0xff]
    %v248 = vld [vmem:[#allocation4 + $0xb0] sm:$0xf]
    %v249 = vld [vmem:[#allocation4 + $0xb4] sm:$0xff]
    %v250 = vld [vmem:[#allocation4 + $0xbc] sm:$0xf]
    %v251 = vld [vmem:[#allocation4 + $0xc0] sm:$0xff]
    %v252 = vld [vmem:[#allocation4 + $0xc8] sm:$0xf]
    %v253 = vld [vmem:[#allocation4 + $0xcc] sm:$0xff]
    %v254 = vld [vmem:[#allocation4 + $0xd4] sm:$0xf]
    %v255 = vld [vmem:[#allocation4 + $0xd8] sm:$0xff]
    %v256 = vld [vmem:[#allocation4 + $0xe0] sm:$0xf]
    %v257 = vld [vmem:[#allocation4 + $0xe4] sm:$0xff]
    %v258 = vld [vmem:[#allocation4 + $0xec] sm:$0xf]
    %v259 = vld [vmem:[#allocation4 + $0xf0] sm:$0xff]
    %v260 = vld [vmem:[#allocation4 + $0xf8] sm:$0xf]
    %v261 = vld [vmem:[#allocation4 + $0xfc] sm:$0xff]
    %v262 = vld [vmem:[#allocation4 + $0x104] sm:$0xf]
    %v263 = vld [vmem:[#allocation4 + $0x108] sm:$0xff]
    %v264 = vld [vmem:[#allocation4 + $0x110] sm:$0xf]
    %v265 = vld [vmem:[#allocation4 + $0x114] sm:$0xff]
    %v266 = vld [vmem:[#allocation4 + $0x11c] sm:$0xf]
    %v267 = vld [vmem:[#allocation4 + $0x120] sm:$0xff]
    %v268 = vld [vmem:[#allocation4 + $0x128] sm:$0xf]
    %v269 = vld [vmem:[#allocation4 + $0x12c] sm:$0xff]
    %v270 = vld [vmem:[#allocation4 + $0x134] sm:$0xf]
    %v271 = vld [vmem:[#allocation4 + $0x138] sm:$0xff]
    %v272 = vld [vmem:[#allocation4 + $0x140] sm:$0xf]
    %v273 = vld [vmem:[#allocation4 + $0x144] sm:$0xff]
    %v274 = vld [vmem:[#allocation4 + $0x14c] sm:$0xf]
    %v275 = vld [vmem:[#allocation4 + $0x150] sm:$0xff]
    %v276 = vld [vmem:[#allocation4 + $0x158] sm:$0xf]
    %v277 = vld [vmem:[#allocation4 + $0x15c] sm:$0xff]
    %v278 = vld [vmem:[#allocation4 + $0x164] sm:$0xf]
    %v279 = vld [vmem:[#allocation4 + $0x168] sm:$0xff]
    %v280 = vld [vmem:[#allocation4 + $0x170] sm:$0xf]
    %v281 = vld [vmem:[#allocation4 + $0x174] sm:$0xff]
    %v282 = vld [vmem:[#allocation4 + $0x17c] sm:$0xf]
    %v283 = vld [vmem:[#allocation4 + $0x180] sm:$0xff]
    %v284 = vld [vmem:[#allocation4 + $0x188] sm:$0xf]
    %v285 = vld [vmem:[#allocation4 + $0x18c] sm:$0xff]
    %v286 = vld [vmem:[#allocation4 + $0x194] sm:$0xf]
    %v287 = vld [vmem:[#allocation4 + $0x198] sm:$0xff]
    %v288 = vld [vmem:[#allocation4 + $0x1a0] sm:$0xf]
    %v289 = vld [vmem:[#allocation4 + $0x1a4] sm:$0xff]
    %v290 = vld [vmem:[#allocation4 + $0x1ac] sm:$0xf]
    %v291 = vld [vmem:[#allocation4 + $0x1b0] sm:$0xff]
    %v292 = vld [vmem:[#allocation4 + $0x1b8] sm:$0xf]
    %v293 = vld [vmem:[#allocation4 + $0x1bc] sm:$0xff]
    %v294 = vld [vmem:[#allocation4 + $0x1c4] sm:$0xf]
    %v295 = vld [vmem:[#allocation4 + $0x1c8] sm:$0xff]
    %v296 = vld [vmem:[#allocation4 + $0x1d0] sm:$0xf]
    %v297 = vld [vmem:[#allocation4 + $0x1d4] sm:$0xff]
    %v298 = vld [vmem:[#allocation4 + $0x1dc] sm:$0xf]
    %v299 = vld [vmem:[#allocation4 + $0x1e0] sm:$0xff]
    %v300 = vld [vmem:[#allocation4 + $0x1e8] sm:$0xf]
    %v301 = vld [vmem:[#allocation4 + $0x1ec] sm:$0xff]
    %v302 = vld [vmem:[#allocation4 + $0x1f4] sm:$0xf]
    %v303 = vld [vmem:[#allocation4 + $0x1f8] sm:$0xff]
    %v304 = vld [vmem:[#allocation4 + $0x200] sm:$0xf]
    %v305 = vld [vmem:[#allocation4 + $0x204] sm:$0xff]
    %v306 = vld [vmem:[#allocation4 + $0x20c] sm:$0xf]
    %v307 = vld [vmem:[#allocation4 + $0x210] sm:$0xff]
    %v308 = vld [vmem:[#allocation4 + $0x218] sm:$0xf]
    %v309 = vld [vmem:[#allocation4 + $0x21c] sm:$0xff]
    %v310 = vld [vmem:[#allocation4 + $0x224] sm:$0xf]
    %v311 = vld [vmem:[#allocation4 + $0x228] sm:$0xff]
    %v312 = vld [vmem:[#allocation4 + $0x230] sm:$0xf]
    %v313 = vld [vmem:[#allocation4 + $0x234] sm:$0xff]
    %v314 = vld [vmem:[#allocation4 + $0x23c] sm:$0xf]
    %v315 = vld [vmem:[#allocation4 + $0x240] sm:$0xff]
    %v316 = vld [vmem:[#allocation4 + $0x248] sm:$0xf]
    %v317 = vld [vmem:[#allocation4 + $0x24c] sm:$0xff]
    %v318 = vld [vmem:[#allocation4 + $0x254] sm:$0xf]
    %v319 = vld [vmem:[%s4] sm:$0x7]
    %v321 = vlaneseq
    %v322 = vshrl.u32 %v321, 7
    %v323 = vsub.s32 0, %v322
    %v324 = vrot.slane %v319, %v323
    %v325 = vlaneseq
    %v326 = vshrl.u32 %v325, 7
    %v327 = vsub.s32 1, %v326
    %v328 = vrot.slane %v319, %v327
    %v329 = vlaneseq
    %v330 = vshrl.u32 %v329, 7
    %v331 = vsub.s32 2, %v330
    %v332 = vrot.slane %v319, %v331
    %v436 = vunpack.c.l.b16 %v219
    %v437 = vunpack.c.h.b16 %v219
    %v438 = vunpack.c.l.b16 %v220
    %v439 = vunpack.c.l.b16 %v221
    %v440 = vunpack.c.h.b16 %v221
    %v441 = vunpack.c.l.b16 %v222
    %v442 = vunpack.c.l.b16 %v223
    %v443 = vunpack.c.h.b16 %v223
    %v444 = vunpack.c.l.b16 %v224
    %v445 = vunpack.c.l.b16 %v225
    %v446 = vunpack.c.h.b16 %v225
    %v447 = vunpack.c.l.b16 %v226
    %v448 = vunpack.c.l.b16 %v227
    %v449 = vunpack.c.h.b16 %v227
    %v450 = vunpack.c.l.b16 %v228
    %v451 = vunpack.c.l.b16 %v229
    %v452 = vunpack.c.h.b16 %v229
    %v453 = vunpack.c.l.b16 %v230
    %v454 = vunpack.c.l.b16 %v231
    %v455 = vunpack.c.h.b16 %v231
    %v456 = vunpack.c.l.b16 %v232
    %v457 = vunpack.c.l.b16 %v233
    %v458 = vunpack.c.h.b16 %v233
    %v459 = vunpack.c.l.b16 %v234
    %v460 = vunpack.c.l.b16 %v235
    %v461 = vunpack.c.h.b16 %v235
    %v462 = vunpack.c.l.b16 %v236
    %v463 = vunpack.c.l.b16 %v237
    %v464 = vunpack.c.h.b16 %v237
    %v465 = vunpack.c.l.b16 %v238
    %v466 = vunpack.c.l.b16 %v239
    %v467 = vunpack.c.h.b16 %v239
    %v468 = vunpack.c.l.b16 %v240
    %v469 = vunpack.c.l.b16 %v241
    %v470 = vunpack.c.h.b16 %v241
    %v471 = vunpack.c.l.b16 %v242
    %v472 = vunpack.c.l.b16 %v243
    %v473 = vunpack.c.h.b16 %v243
    %v474 = vunpack.c.l.b16 %v244
    %v475 = vunpack.c.l.b16 %v245
    %v476 = vunpack.c.h.b16 %v245
    %v477 = vunpack.c.l.b16 %v246
    %v478 = vunpack.c.l.b16 %v247
    %v479 = vunpack.c.h.b16 %v247
    %v480 = vunpack.c.l.b16 %v248
    %v481 = vunpack.c.l.b16 %v249
    %v482 = vunpack.c.h.b16 %v249
    %v483 = vunpack.c.l.b16 %v250
    %v484 = vunpack.c.l.b16 %v251
    %v485 = vunpack.c.h.b16 %v251
    %v486 = vunpack.c.l.b16 %v252
    %v487 = vunpack.c.l.b16 %v253
    %v488 = vunpack.c.h.b16 %v253
    %v489 = vunpack.c.l.b16 %v254
    %v490 = vunpack.c.l.b16 %v255
    %v491 = vunpack.c.h.b16 %v255
    %v492 = vunpack.c.l.b16 %v256
    %v493 = vunpack.c.l.b16 %v257
    %v494 = vunpack.c.h.b16 %v257
    %v495 = vunpack.c.l.b16 %v258
    %v496 = vunpack.c.l.b16 %v259
    %v497 = vunpack.c.h.b16 %v259
    %v498 = vunpack.c.l.b16 %v260
    %v499 = vunpack.c.l.b16 %v261
    %v500 = vunpack.c.h.b16 %v261
    %v501 = vunpack.c.l.b16 %v262
    %v502 = vunpack.c.l.b16 %v263
    %v503 = vunpack.c.h.b16 %v263
    %v504 = vunpack.c.l.b16 %v264
    %v505 = vunpack.c.l.b16 %v265
    %v506 = vunpack.c.h.b16 %v265
    %v507 = vunpack.c.l.b16 %v266
    %v508 = vunpack.c.l.b16 %v267
    %v509 = vunpack.c.h.b16 %v267
    %v510 = vunpack.c.l.b16 %v268
    %v511 = vunpack.c.l.b16 %v269
    %v512 = vunpack.c.h.b16 %v269
    %v513 = vunpack.c.l.b16 %v270
    %v514 = vunpack.c.l.b16 %v271
    %v515 = vunpack.c.h.b16 %v271
    %v516 = vunpack.c.l.b16 %v272
    %v517 = vunpack.c.l.b16 %v273
    %v518 = vunpack.c.h.b16 %v273
    %v519 = vunpack.c.l.b16 %v274
    %v520 = vunpack.c.l.b16 %v275
    %v521 = vunpack.c.h.b16 %v275
    %v522 = vunpack.c.l.b16 %v276
    %v523 = vunpack.c.l.b16 %v277
    %v524 = vunpack.c.h.b16 %v277
    %v525 = vunpack.c.l.b16 %v278
    %v526 = vunpack.c.l.b16 %v279
    %v527 = vunpack.c.h.b16 %v279
    %v528 = vunpack.c.l.b16 %v280
    %v529 = vunpack.c.l.b16 %v281
    %v530 = vunpack.c.h.b16 %v281
    %v531 = vunpack.c.l.b16 %v282
    %v532 = vunpack.c.l.b16 %v283
    %v533 = vunpack.c.h.b16 %v283
    %v534 = vunpack.c.l.b16 %v284
    %v535 = vunpack.c.l.b16 %v285
    %v536 = vunpack.c.h.b16 %v285
    %v537 = vunpack.c.l.b16 %v286
    %v538 = vunpack.c.l.b16 %v287
    %v539 = vunpack.c.h.b16 %v287
    %v540 = vunpack.c.l.b16 %v288
    %v541 = vunpack.c.l.b16 %v289
    %v542 = vunpack.c.h.b16 %v289
    %v543 = vunpack.c.l.b16 %v290
    %v544 = vunpack.c.l.b16 %v291
    %v545 = vunpack.c.h.b16 %v291
    %v546 = vunpack.c.l.b16 %v292
    %v547 = vunpack.c.l.b16 %v293
    %v548 = vunpack.c.h.b16 %v293
    %v549 = vunpack.c.l.b16 %v294
    %v550 = vunpack.c.l.b16 %v295
    %v551 = vunpack.c.h.b16 %v295
    %v552 = vunpack.c.l.b16 %v296
    %v553 = vunpack.c.l.b16 %v297
    %v554 = vunpack.c.h.b16 %v297
    %v555 = vunpack.c.l.b16 %v298
    %v556 = vunpack.c.l.b16 %v299
    %v557 = vunpack.c.h.b16 %v299
    %v558 = vunpack.c.l.b16 %v300
    %v559 = vunpack.c.l.b16 %v301
    %v560 = vunpack.c.h.b16 %v301
    %v561 = vunpack.c.l.b16 %v302
    %v562 = vunpack.c.l.b16 %v303
    %v563 = vunpack.c.h.b16 %v303
    %v564 = vunpack.c.l.b16 %v304
    %v565 = vunpack.c.l.b16 %v305
    %v566 = vunpack.c.h.b16 %v305
    %v567 = vunpack.c.l.b16 %v306
    %v568 = vunpack.c.l.b16 %v307
    %v569 = vunpack.c.h.b16 %v307
    %v570 = vunpack.c.l.b16 %v308
    %v571 = vunpack.c.l.b16 %v309
    %v572 = vunpack.c.h.b16 %v309
    %v573 = vunpack.c.l.b16 %v310
    %v574 = vunpack.c.l.b16 %v311
    %v575 = vunpack.c.h.b16 %v311
    %v576 = vunpack.c.l.b16 %v312
    %v577 = vunpack.c.l.b16 %v313
    %v578 = vunpack.c.h.b16 %v313
    %v579 = vunpack.c.l.b16 %v314
    %v580 = vunpack.c.l.b16 %v315
    %v581 = vunpack.c.h.b16 %v315
    %v582 = vunpack.c.l.b16 %v316
    %v583 = vunpack.c.l.b16 %v317
    %v584 = vunpack.c.h.b16 %v317
    %v585 = vunpack.c.l.b16 %v318
    %v586 = vpack.c.b16 %v439, %v436
    %v587 = vpack.c.b16 %v440, %v437
    %v588 = vpack.c.b16 %v441, %v438
    %v589 = vpack.c.b16 %v445, %v442
    %v590 = vpack.c.b16 %v446, %v443
    %v591 = vpack.c.b16 %v447, %v444
    %v592 = vpack.c.b16 %v451, %v448
    %v593 = vpack.c.b16 %v452, %v449
    %v594 = vpack.c.b16 %v453, %v450
    %v595 = vpack.c.b16 %v457, %v454
    %v596 = vpack.c.b16 %v458, %v455
    %v597 = vpack.c.b16 %v459, %v456
    %v598 = vpack.c.b16 %v463, %v460
    %v599 = vpack.c.b16 %v464, %v461
    %v600 = vpack.c.b16 %v465, %v462
    %v601 = vpack.c.b16 %v469, %v466
    %v602 = vpack.c.b16 %v470, %v467
    %v603 = vpack.c.b16 %v471, %v468
    %v604 = vpack.c.b16 %v475, %v472
    %v605 = vpack.c.b16 %v476, %v473
    %v606 = vpack.c.b16 %v477, %v474
    %v607 = vpack.c.b16 %v481, %v478
    %v608 = vpack.c.b16 %v482, %v479
    %v609 = vpack.c.b16 %v483, %v480
    %v610 = vpack.c.b16 %v487, %v484
    %v611 = vpack.c.b16 %v488, %v485
    %v612 = vpack.c.b16 %v489, %v486
    %v613 = vpack.c.b16 %v493, %v490
    %v614 = vpack.c.b16 %v494, %v491
    %v615 = vpack.c.b16 %v495, %v492
    %v616 = vpack.c.b16 %v499, %v496
    %v617 = vpack.c.b16 %v500, %v497
    %v618 = vpack.c.b16 %v501, %v498
    %v619 = vpack.c.b16 %v505, %v502
    %v620 = vpack.c.b16 %v506, %v503
    %v621 = vpack.c.b16 %v507, %v504
    %v622 = vpack.c.b16 %v511, %v508
    %v623 = vpack.c.b16 %v512, %v509
    %v624 = vpack.c.b16 %v513, %v510
    %v625 = vpack.c.b16 %v517, %v514
    %v626 = vpack.c.b16 %v518, %v515
    %v627 = vpack.c.b16 %v519, %v516
    %v628 = vpack.c.b16 %v523, %v520
    %v629 = vpack.c.b16 %v524, %v521
    %v630 = vpack.c.b16 %v525, %v522
    %v631 = vpack.c.b16 %v529, %v526
    %v632 = vpack.c.b16 %v530, %v527
    %v633 = vpack.c.b16 %v531, %v528
    %v634 = vpack.c.b16 %v535, %v532
    %v635 = vpack.c.b16 %v536, %v533
    %v636 = vpack.c.b16 %v537, %v534
    %v637 = vpack.c.b16 %v541, %v538
    %v638 = vpack.c.b16 %v542, %v539
    %v639 = vpack.c.b16 %v543, %v540
    %v640 = vpack.c.b16 %v547, %v544
    %v641 = vpack.c.b16 %v548, %v545
    %v642 = vpack.c.b16 %v549, %v546
    %v643 = vpack.c.b16 %v553, %v550
    %v644 = vpack.c.b16 %v554, %v551
    %v645 = vpack.c.b16 %v555, %v552
    %v646 = vpack.c.b16 %v559, %v556
    %v647 = vpack.c.b16 %v560, %v557
    %v648 = vpack.c.b16 %v561, %v558
    %v649 = vpack.c.b16 %v565, %v562
    %v650 = vpack.c.b16 %v566, %v563
    %v651 = vpack.c.b16 %v567, %v564
    %v652 = vpack.c.b16 %v571, %v568
    %v653 = vpack.c.b16 %v572, %v569
    %v654 = vpack.c.b16 %v573, %v570
    %v655 = vpack.c.b16 %v577, %v574
    %v656 = vpack.c.b16 %v578, %v575
    %v657 = vpack.c.b16 %v579, %v576
    %v658 = vpack.c.b16 %v583, %v580
    %v659 = vpack.c.b16 %v584, %v581
    %v660 = vpack.c.b16 %v585, %v582
    %v737 = vsel %vm117, %v218, 0
    %739 = vmatprep.subr.bf16.mxu0 %v587
    %740 = vmatpush1.bf16.msra.mxu0 %v586
    %741 = vmatprep.subr.bf16.mxu0 %v590
    %742 = vmatpush1.bf16.msra.mxu0 %v589
    %743 = vmatprep.subr.bf16.mxu0 %v593
    %744 = vmatpush1.bf16.msra.mxu0 %v592
    %745 = vmatprep.subr.bf16.mxu0 %v596
    %746 = vmatpush1.bf16.msra.mxu0 %v595
    %747 = vmatprep.subr.bf16.mxu0 %v599
    %748 = vmatpush1.bf16.msra.mxu0 %v598
    %749 = vmatprep.subr.bf16.mxu0 %v602
    %750 = vmatpush1.bf16.msra.mxu0 %v601
    %751 = vmatprep.subr.bf16.mxu0 %v605
    %752 = vmatpush1.bf16.msra.mxu0 %v604
    %753 = vmatprep.subr.bf16.mxu0 %v608
    %754 = vmatpush1.bf16.msra.mxu0 %v607
    %755 = vmatprep.subr.bf16.mxu0 %v611
    %756 = vmatpush1.bf16.msra.mxu0 %v610
    %757 = vmatprep.subr.bf16.mxu0 %v614
    %758 = vmatpush1.bf16.msra.mxu0 %v613
    %759 = vmatprep.subr.bf16.mxu0 %v617
    %760 = vmatpush1.bf16.msra.mxu0 %v616
    %761 = vmatprep.subr.bf16.mxu0 %v620
    %762 = vmatpush1.bf16.msra.mxu0 %v619
    %763 = vmatprep.subr.bf16.mxu0 %v623
    %764 = vmatpush1.bf16.msra.mxu0 %v622
    %765 = vmatprep.subr.bf16.mxu0 %v626
    %766 = vmatpush1.bf16.msra.mxu0 %v625
    %767 = vmatprep.subr.bf16.mxu0 %v629
    %768 = vmatpush1.bf16.msra.mxu0 %v628
    %769 = vmatprep.subr.bf16.mxu0 %v632
    %770 = vmatpush1.bf16.msra.mxu0 %v631
    %771 = vmatprep.mubr.bf16.mxu0 %v216
    %772 = vmatmul.mubr.bf16.gmra.mrb[0].mxu0 %v215
    %v773 = vpop.f32.mrb[0].mxu0
    %v774 = vadd.f32 %v324, %v773
    %v775 = vpop.f32.mrb[0].mxu0
    %v776 = vadd.f32 %v328, %v775
    %v777 = vpop.f32.mrb[0].mxu0
    %v778 = vadd.f32 %v324, %v777
    %v779 = vpop.f32.mrb[0].mxu0
    %v780 = vadd.f32 %v328, %v779
    %781 = vdwg.mxu0
    %782 = vmatprep.subr.bf16.mxu0 %v635
    %783 = vmatpush1.bf16.msra.mxu0 %v634
    %784 = vmatprep.subr.bf16.mxu0 %v638
    %785 = vmatpush1.bf16.msra.mxu0 %v637
    %786 = vmatprep.subr.bf16.mxu0 %v641
    %787 = vmatpush1.bf16.msra.mxu0 %v640
    %788 = vmatprep.subr.bf16.mxu0 %v644
    %789 = vmatpush1.bf16.msra.mxu0 %v643
    %790 = vmatprep.subr.bf16.mxu0 %v647
    %791 = vmatpush1.bf16.msra.mxu0 %v646
    %792 = vmatprep.subr.bf16.mxu0 %v650
    %793 = vmatpush1.bf16.msra.mxu0 %v649
    %794 = vmatprep.subr.bf16.mxu0 %v653
    %795 = vmatpush1.bf16.msra.mxu0 %v652
    %796 = vmatprep.subr.bf16.mxu0 %v656
    %797 = vmatpush1.bf16.msra.mxu0 %v655
    %798 = vmatprep.subr.bf16.mxu0 %v659
    %799 = vmatpush1.bf16.msra.mxu0 %v658
    %800 = vmatprep.subr.bf16.mxu0 0
    %801 = vmatpush1.bf16.msra.mxu0 0
    %802 = vmatprep.subr.bf16.mxu0 0
    %803 = vmatpush1.bf16.msra.mxu0 0
    %804 = vmatprep.subr.bf16.mxu0 0
    %805 = vmatpush1.bf16.msra.mxu0 0
    %806 = vmatprep.subr.bf16.mxu0 0
    %807 = vmatpush1.bf16.msra.mxu0 0
    %808 = vmatprep.subr.bf16.mxu0 0
    %809 = vmatpush1.bf16.msra.mxu0 0
    %810 = vmatprep.subr.bf16.mxu0 0
    %811 = vmatpush1.bf16.msra.mxu0 0
    %812 = vmatprep.subr.bf16.mxu0 0
    %813 = vmatpush1.bf16.msra.mxu0 0
    %814 = vmatprep.mubr.bf16.mxu0 %v737
    %815 = vmatmul.mubr.bf16.gmra.mrb[0].mxu0 %v217
    %v816 = vpop.f32.mrb[0].mxu0
    %v817 = vadd.f32 %v774, %v816
    %v818 = vpop.f32.mrb[0].mxu0
    %v819 = vadd.f32 %v776, %v818
    %v820 = vpop.f32.mrb[0].mxu0
    %v821 = vadd.f32 %v778, %v820
    %v822 = vpop.f32.mrb[0].mxu0
    %v823 = vadd.f32 %v780, %v822
    %824 = vdwg.mxu0
    %825 = vmatprep.subr.bf16.mxu0 0
    %826 = vmatpush1.bf16.msra.mxu0 %v588
    %827 = vmatprep.subr.bf16.mxu0 0
    %828 = vmatpush1.bf16.msra.mxu0 %v591
    %829 = vmatprep.subr.bf16.mxu0 0
    %830 = vmatpush1.bf16.msra.mxu0 %v594
    %831 = vmatprep.subr.bf16.mxu0 0
    %832 = vmatpush1.bf16.msra.mxu0 %v597
    %833 = vmatprep.subr.bf16.mxu0 0
    %834 = vmatpush1.bf16.msra.mxu0 %v600
    %835 = vmatprep.subr.bf16.mxu0 0
    %836 = vmatpush1.bf16.msra.mxu0 %v603
    %837 = vmatprep.subr.bf16.mxu0 0
    %838 = vmatpush1.bf16.msra.mxu0 %v606
    %839 = vmatprep.subr.bf16.mxu0 0
    %840 = vmatpush1.bf16.msra.mxu0 %v609
    %841 = vmatprep.subr.bf16.mxu0 0
    %842 = vmatpush1.bf16.msra.mxu0 %v612
    %843 = vmatprep.subr.bf16.mxu0 0
    %844 = vmatpush1.bf16.msra.mxu0 %v615
    %845 = vmatprep.subr.bf16.mxu0 0
    %846 = vmatpush1.bf16.msra.mxu0 %v618
    %847 = vmatprep.subr.bf16.mxu0 0
    %848 = vmatpush1.bf16.msra.mxu0 %v621
    %849 = vmatprep.subr.bf16.mxu0 0
    %850 = vmatpush1.bf16.msra.mxu0 %v624
    %851 = vmatprep.subr.bf16.mxu0 0
    %852 = vmatpush1.bf16.msra.mxu0 %v627
    %853 = vmatprep.subr.bf16.mxu0 0
    %854 = vmatpush1.bf16.msra.mxu0 %v630
    %855 = vmatprep.subr.bf16.mxu0 0
    %856 = vmatpush1.bf16.msra.mxu0 %v633
    %857 = vmatprep.mubr.bf16.mxu0 %v216
    %858 = vmatmul.mubr.bf16.gmra.mrb[0].mxu0 %v215
    %v859 = vpop.f32.mrb[0].mxu0
    %v860 = vadd.f32 %v332, %v859
    %v861 = vpop.f32.mrb[0].mxu0
    %v862 = vpop.f32.mrb[0].mxu0
    %v863 = vadd.f32 %v332, %v862
    %v864 = vpop.f32.mrb[0].mxu0
    %865 = vdwg.mxu0
    %866 = vmatprep.subr.bf16.mxu0 0
    %867 = vmatpush1.bf16.msra.mxu0 %v636
    %868 = vmatprep.subr.bf16.mxu0 0
    %869 = vmatpush1.bf16.msra.mxu0 %v639
    %870 = vmatprep.subr.bf16.mxu0 0
    %871 = vmatpush1.bf16.msra.mxu0 %v642
    %872 = vmatprep.subr.bf16.mxu0 0
    %873 = vmatpush1.bf16.msra.mxu0 %v645
    %874 = vmatprep.subr.bf16.mxu0 0
    %875 = vmatpush1.bf16.msra.mxu0 %v648
    %876 = vmatprep.subr.bf16.mxu0 0
    %877 = vmatpush1.bf16.msra.mxu0 %v651
    %878 = vmatprep.subr.bf16.mxu0 0
    %879 = vmatpush1.bf16.msra.mxu0 %v654
    %880 = vmatprep.subr.bf16.mxu0 0
    %881 = vmatpush1.bf16.msra.mxu0 %v657
    %882 = vmatprep.subr.bf16.mxu0 0
    %883 = vmatpush1.bf16.msra.mxu0 %v660
    %884 = vmatprep.subr.bf16.mxu0 0
    %885 = vmatpush1.bf16.msra.mxu0 0
    %886 = vmatprep.subr.bf16.mxu0 0
    %887 = vmatpush1.bf16.msra.mxu0 0
    %888 = vmatprep.subr.bf16.mxu0 0
    %889 = vmatpush1.bf16.msra.mxu0 0
    %890 = vmatprep.subr.bf16.mxu0 0
    %891 = vmatpush1.bf16.msra.mxu0 0
    %892 = vmatprep.subr.bf16.mxu0 0
    %893 = vmatpush1.bf16.msra.mxu0 0
    %894 = vmatprep.subr.bf16.mxu0 0
    %895 = vmatpush1.bf16.msra.mxu0 0
    %896 = vmatprep.subr.bf16.mxu0 0
    %897 = vmatpush1.bf16.msra.mxu0 0
    %898 = vmatprep.mubr.bf16.mxu0 %v737
    %899 = vmatmul.mubr.bf16.gmra.mrb[0].mxu0 %v217
    %v900 = vpop.f32.mrb[0].mxu0
    %v901 = vadd.f32 %v860, %v900
    %v902 = vpop.f32.mrb[0].mxu0
    %v903 = vpop.f32.mrb[0].mxu0
    %v904 = vadd.f32 %v863, %v903
    %v905 = vpop.f32.mrb[0].mxu0
    %906 = vdwg.mxu0
    %v907 = vmax.f32 %v817, 0.0
    %v908 = vmax.f32 %v819, 0.0
    %v909 = vmax.f32 %v901, 0.0
    %v910 = vmax.f32 %v821, 0.0
    %v911 = vmax.f32 %v823, 0.0
    %v912 = vmax.f32 %v904, 0.0
    %v913 = vld [vmem:[#allocation6] sm:$0xff]
    %v914 = vld [vmem:[#allocation6 + $0x8] sm:$0xff]
    %v915 = vld [vmem:[#allocation6 + $0x10] sm:$0xff]
    %v916 = vld [vmem:[#allocation6 + $0x18] sm:$0xff]
    %v917 = vld [vmem:[#allocation6 + $0x20] sm:$0xff]
    %v918 = vld [vmem:[#allocation6 + $0x28] sm:$0xff]
    %v919 = vld [vmem:[#allocation6 + $0x30] sm:$0xff]
    %v920 = vld [vmem:[#allocation6 + $0x38] sm:$0xff]
    %v921 = vld [vmem:[#allocation6 + $0x40] sm:$0xff]
    %v922 = vld [vmem:[#allocation6 + $0x48] sm:$0xff]
    %v923 = vld [vmem:[#allocation6 + $0x50] sm:$0xff]
    %v924 = vld [vmem:[#allocation6 + $0x58] sm:$0xff]
    %v925 = vld [vmem:[#allocation6 + $0x60] sm:$0xff]
    %v926 = vld [vmem:[#allocation6 + $0x68] sm:$0xff]
    %v927 = vld [vmem:[#allocation6 + $0x70] sm:$0xff]
    %v928 = vld [vmem:[#allocation6 + $0x78] sm:$0xff]
    %v929 = vld [vmem:[#allocation6 + $0x80] sm:$0xff]
    %v930 = vld [vmem:[#allocation6 + $0x88] sm:$0xff]
    %v931 = vld [vmem:[#allocation6 + $0x90] sm:$0xff]
    %v932 = vld [vmem:[#allocation6 + $0x98] sm:$0xff]
    %v933 = vld [vmem:[#allocation6 + $0xa0] sm:$0xff]
    %v934 = vld [vmem:[#allocation6 + $0xa8] sm:$0xff]
    %v935 = vld [vmem:[#allocation6 + $0xb0] sm:$0xff]
    %v936 = vld [vmem:[#allocation6 + $0xb8] sm:$0xff]
    %v937 = vld [vmem:[#allocation6 + $0xc0] sm:$0xff]
    %v938 = vld [vmem:[#allocation6 + $0xc8] sm:$0xff]
    %v939 = vld [vmem:[#allocation6 + $0xd0] sm:$0xff]
    %v940 = vld [vmem:[#allocation6 + $0xd8] sm:$0xff]
    %v941 = vld [vmem:[#allocation6 + $0xe0] sm:$0xff]
    %v942 = vld [vmem:[#allocation6 + $0xe8] sm:$0xff]
    %v943 = vld [vmem:[#allocation6 + $0xf0] sm:$0xff]
    %v944 = vld [vmem:[#allocation6 + $0xf8] sm:$0xff]
    %v945 = vld [vmem:[#allocation6 + $0x100] sm:$0xff]
    %v946 = vld [vmem:[#allocation6 + $0x108] sm:$0xff]
    %v947 = vld [vmem:[#allocation6 + $0x110] sm:$0xff]
    %v948 = vld [vmem:[#allocation6 + $0x118] sm:$0xff]
    %v949 = vld [vmem:[#allocation6 + $0x120] sm:$0xff]
    %v950 = vld [vmem:[#allocation6 + $0x128] sm:$0xf]
    %v951 = vld [vmem:[%s6] sm:$0x1]
    %v953 = vlaneseq
    %v954 = vshrl.u32 %v953, 7
    %v955 = vsub.s32 0, %v954
    %v956 = vrot.slane %v951, %v955
    %vm958 = vcmask 359424
    %v960 = vsel %vm958, %v909, 0
    %v963 = vsel %vm958, %v912, 0
    %vm965 = vcmask 1043456
    %v967 = vsel %vm965, %v950, 0
    %969 = vmatprep.subr.mxu0 0.0
    %970 = vmatpush1.msra.mxu0 %v913
    %971 = vmatprep.subr.mxu0 0.0
    %972 = vmatpush1.msra.mxu0 %v914
    %973 = vmatprep.subr.mxu0 0.0
    %974 = vmatpush1.msra.mxu0 %v915
    %975 = vmatprep.subr.mxu0 0.0
    %976 = vmatpush1.msra.mxu0 %v916
    %977 = vmatprep.subr.mxu0 0.0
    %978 = vmatpush1.msra.mxu0 %v917
    %979 = vmatprep.subr.mxu0 0.0
    %980 = vmatpush1.msra.mxu0 %v918
    %981 = vmatprep.subr.mxu0 0.0
    %982 = vmatpush1.msra.mxu0 %v919
    %983 = vmatprep.subr.mxu0 0.0
    %984 = vmatpush1.msra.mxu0 %v920
    %985 = vmatprep.subr.mxu0 0.0
    %986 = vmatpush1.msra.mxu0 %v921
    %987 = vmatprep.subr.mxu0 0.0
    %988 = vmatpush1.msra.mxu0 %v922
    %989 = vmatprep.subr.mxu0 0.0
    %990 = vmatpush1.msra.mxu0 %v923
    %991 = vmatprep.subr.mxu0 0.0
    %992 = vmatpush1.msra.mxu0 %v924
    %993 = vmatprep.subr.mxu0 0.0
    %994 = vmatpush1.msra.mxu0 %v925
    %995 = vmatprep.subr.mxu0 0.0
    %996 = vmatpush1.msra.mxu0 %v926
    %997 = vmatprep.subr.mxu0 0.0
    %998 = vmatpush1.msra.mxu0 %v927
    %999 = vmatprep.subr.mxu0 0.0
    %1000 = vmatpush1.msra.mxu0 %v928
    %1001 = vmatprep.subr.mxu0 0.0
    %1002 = vmatpush1.msra.mxu0 %v929
    %1003 = vmatprep.subr.mxu0 0.0
    %1004 = vmatpush1.msra.mxu0 %v930
    %1005 = vmatprep.subr.mxu0 0.0
    %1006 = vmatpush1.msra.mxu0 %v931
    %1007 = vmatprep.subr.mxu0 0.0
    %1008 = vmatpush1.msra.mxu0 %v932
    %1009 = vmatprep.subr.mxu0 0.0
    %1010 = vmatpush1.msra.mxu0 %v933
    %1011 = vmatprep.subr.mxu0 0.0
    %1012 = vmatpush1.msra.mxu0 %v934
    %1013 = vmatprep.subr.mxu0 0.0
    %1014 = vmatpush1.msra.mxu0 %v935
    %1015 = vmatprep.subr.mxu0 0.0
    %1016 = vmatpush1.msra.mxu0 %v936
    %1017 = vmatprep.subr.mxu0 0.0
    %1018 = vmatpush1.msra.mxu0 %v937
    %1019 = vmatprep.subr.mxu0 0.0
    %1020 = vmatpush1.msra.mxu0 %v938
    %1021 = vmatprep.subr.mxu0 0.0
    %1022 = vmatpush1.msra.mxu0 %v939
    %1023 = vmatprep.subr.mxu0 0.0
    %1024 = vmatpush1.msra.mxu0 %v940
    %1025 = vmatprep.subr.mxu0 0.0
    %1026 = vmatpush1.msra.mxu0 %v941
    %1027 = vmatprep.subr.mxu0 0.0
    %1028 = vmatpush1.msra.mxu0 %v942
    %1029 = vmatprep.subr.mxu0 0.0
    %1030 = vmatpush1.msra.mxu0 %v943
    %1031 = vmatprep.subr.mxu0 0.0
    %1032 = vmatpush1.msra.mxu0 %v944
    %1033 = vmatprep.mubr.f32.mxu0 %v908
    %1034 = vmatmul.mubr.f32.gmra.mrb[0].mxu0 %v907
    %v1035 = vpop.f32.mrb[0].mxu0
    %v1036 = vadd.f32 %v956, %v1035
    %v1037 = vpop.f32.mrb[0].mxu0
    %1038 = vmatprep.mubr.f32.mxu0 %v911
    %1039 = vmatmul.mubr.f32.gmra.mrb[0].mxu0 %v910
    %v1040 = vpop.f32.mrb[0].mxu0
    %v1041 = vadd.f32 %v956, %v1040
    %v1042 = vpop.f32.mrb[0].mxu0
    %1043 = vdwg.mxu0
    %1044 = vmatprep.subr.mxu0 0.0
    %1045 = vmatpush1.msra.mxu0 %v945
    %1046 = vmatprep.subr.mxu0 0.0
    %1047 = vmatpush1.msra.mxu0 %v946
    %1048 = vmatprep.subr.mxu0 0.0
    %1049 = vmatpush1.msra.mxu0 %v947
    %1050 = vmatprep.subr.mxu0 0.0
    %1051 = vmatpush1.msra.mxu0 %v948
    %1052 = vmatprep.subr.mxu0 0.0
    %1053 = vmatpush1.msra.mxu0 %v949
    %1054 = vmatprep.subr.mxu0 0.0
    %1055 = vmatpush1.msra.mxu0 %v967
    %1056 = vmatprep.subr.mxu0 0.0
    %1057 = vmatpush1.msra.mxu0 0.0
    %1058 = vmatprep.subr.mxu0 0.0
    %1059 = vmatpush1.msra.mxu0 0.0
    %1060 = vmatprep.subr.mxu0 0.0
    %1061 = vmatpush1.msra.mxu0 0.0
    %1062 = vmatprep.subr.mxu0 0.0
    %1063 = vmatpush1.msra.mxu0 0.0
    %1064 = vmatprep.subr.mxu0 0.0
    %1065 = vmatpush1.msra.mxu0 0.0
    %1066 = vmatprep.subr.mxu0 0.0
    %1067 = vmatpush1.msra.mxu0 0.0
    %1068 = vmatprep.subr.mxu0 0.0
    %1069 = vmatpush1.msra.mxu0 0.0
    %1070 = vmatprep.subr.mxu0 0.0
    %1071 = vmatpush1.msra.mxu0 0.0
    %1072 = vmatprep.subr.mxu0 0.0
    %1073 = vmatpush1.msra.mxu0 0.0
    %1074 = vmatprep.subr.mxu0 0.0
    %1075 = vmatpush1.msra.mxu0 0.0
    %1076 = vmatprep.subr.mxu0 0.0
    %1077 = vmatpush1.msra.mxu0 0.0
    %1078 = vmatprep.subr.mxu0 0.0
    %1079 = vmatpush1.msra.mxu0 0.0
    %1080 = vmatprep.subr.mxu0 0.0
    %1081 = vmatpush1.msra.mxu0 0.0
    %1082 = vmatprep.subr.mxu0 0.0
    %1083 = vmatpush1.msra.mxu0 0.0
    %1084 = vmatprep.subr.mxu0 0.0
    %1085 = vmatpush1.msra.mxu0 0.0
    %1086 = vmatprep.subr.mxu0 0.0
    %1087 = vmatpush1.msra.mxu0 0.0
    %1088 = vmatprep.subr.mxu0 0.0
    %1089 = vmatpush1.msra.mxu0 0.0
    %1090 = vmatprep.subr.mxu0 0.0
    %1091 = vmatpush1.msra.mxu0 0.0
    %1092 = vmatprep.subr.mxu0 0.0
    %1093 = vmatpush1.msra.mxu0 0.0
    %1094 = vmatprep.subr.mxu0 0.0
    %1095 = vmatpush1.msra.mxu0 0.0
    %1096 = vmatprep.subr.mxu0 0.0
    %1097 = vmatpush1.msra.mxu0 0.0
    %1098 = vmatprep.subr.mxu0 0.0
    %1099 = vmatpush1.msra.mxu0 0.0
    %1100 = vmatprep.subr.mxu0 0.0
    %1101 = vmatpush1.msra.mxu0 0.0
    %1102 = vmatprep.subr.mxu0 0.0
    %1103 = vmatpush1.msra.mxu0 0.0
    %1104 = vmatprep.subr.mxu0 0.0
    %1105 = vmatpush1.msra.mxu0 0.0
    %1106 = vmatprep.subr.mxu0 0.0
    %1107 = vmatpush1.msra.mxu0 0.0
    %1108 = vmatprep.mubr.f32.mxu0 0.0
    %1109 = vmatmul.mubr.f32.gmra.mrb[0].mxu0 %v960
    %v1110 = vpop.f32.mrb[0].mxu0
    %v1111 = vadd.f32 %v1036, %v1110
    %v1112 = vpop.f32.mrb[0].mxu0
    %1113 = vmatprep.mubr.f32.mxu0 0.0
    %1114 = vmatmul.mubr.f32.gmra.mrb[0].mxu0 %v963
    %v1115 = vpop.f32.mrb[0].mxu0
    %v1116 = vadd.f32 %v1041, %v1115
    %v1117 = vpop.f32.mrb[0].mxu0
    %1118 = vdwg.mxu0
    %1119 = vst [vmem:[%s7] sm:$0xff] %v1111
    %1120 = vst [vmem:[%s7 + $0x8] sm:$0xff] %v1116
    // Predicated region
    $region42: #{qnetwork_forward.1} parent=1 // pred_check
      _
    $region43: #{qnetwork_forward.1} parent=1 // pred_check_branch
      %1122 = sbr.rel (0) target = $region45
    $region44: #{qnetwork_forward.1} parent=1 // pred_region
      _
    $region45: #{qnetwork_forward.1} parent=1 // pred_fallthru
      _
    // Predicated region
    $region46: #{qnetwork_forward.1} parent=1 // pred_check
      _
    $region47: #{qnetwork_forward.1} parent=1 // pred_check_branch
      %1124 = sbr.rel (0) target = $region49
    $region48: #{qnetwork_forward.1} parent=1 // pred_region
      _
    $region49: #{qnetwork_forward.1} parent=1 // pred_fallthru
      _
    %1125 = vsyncpa [#allocation3], 1
    %1126 = vsyncpa [#allocation5], 1

</llo_original>
